<compile_context>
chip_gen: v6e
topology: v6e:2x2x1
jax: 0.10.0
libtpu: 0.0.40
codegen_flags: <defaults>
</compile_context>

<pallas_src>
import jax
import jax.numpy as jnp
from jax.experimental import pallas as pl
from jax.experimental.pallas import tpu as pltpu


def _round_up(v, m):
    return (v + m - 1) // m * m


def _linear_kernel(x_ref, w_ref, b_ref, o_ref, acc_ref):
    k = pl.program_id(2)

    @pl.when(k == 0)
    def _():
        acc_ref[...] = jnp.zeros_like(acc_ref)

    # MXU matmul, f32 accumulate into the resident VMEM scratch tile.
    acc_ref[...] += jnp.dot(
        x_ref[...], w_ref[...], preferred_element_type=jnp.float32
    )

    @pl.when(k == pl.num_programs(2) - 1)
    def _():
        out = acc_ref[...] + b_ref[...]
        # TODO(synk): training-mode dropout needs RNG (pltpu.prng_*); this
        # kernel implements eval-mode semantics (dropout == identity).
        o_ref[...] = out.astype(o_ref.dtype)


def linear_forward(x, w, b, *, tm=128, tn=128, tk=128):
    """y = x @ w.T + b  (nn.Linear forward; dropout is identity in eval mode).

    x: (M, K) float32
    w: (N, K) float32   (PyTorch nn.Linear weight layout)
    b: (N,)   float32
    returns (M, N) float32
    """
    m, k = x.shape
    n, k_w = w.shape
    assert k_w == k, "weight/input feature mismatch"
    assert b.shape == (n,)

    # One cheap XLA transpose outside the kernel so the kernel is a plain
    # row-major (M,K)@(K,N) tiled matmul.
    wt = w.T                     # (K, N)
    b2 = b.reshape(1, n)         # keep bias 2-D for TPU lane layout

    # Pad everything to lane-dense tile multiples (last dim multiple of 128).
    mp = _round_up(m, tm)
    kp = _round_up(k, tk)
    np_ = _round_up(n, tn)

    x_p = jnp.pad(x, ((0, mp - m), (0, kp - k)))
    w_p = jnp.pad(wt, ((0, kp - k), (0, np_ - n)))
    b_p = jnp.pad(b2, ((0, 0), (0, np_ - n)))

    grid = (mp // tm, np_ // tn, kp // tk)

    cost = pl.CostEstimate(
        flops=2 * mp * kp * np_,
        transcendentals=0,
        bytes_accessed=4 * (mp * kp + kp * np_ + np_ + mp * np_),
    )

    out_p = pl.pallas_call(
        _linear_kernel,
        out_shape=jax.ShapeDtypeStruct((mp, np_), x.dtype),
        grid_spec=pltpu.PrefetchScalarGridSpec(
            num_scalar_prefetch=0,
            grid=grid,
            in_specs=[
                pl.BlockSpec((tm, tk), lambda i, j, kk: (i, kk)),   # x tile
                pl.BlockSpec((tk, tn), lambda i, j, kk: (kk, j)),   # W.T tile
                pl.BlockSpec((1, tn), lambda i, j, kk: (0, j)),     # bias tile
            ],
            out_specs=pl.BlockSpec((tm, tn), lambda i, j, kk: (i, j)),
            scratch_shapes=[pltpu.VMEM((tm, tn), jnp.float32)],
        ),
        compiler_params=pltpu.CompilerParams(
            dimension_semantics=("parallel", "parallel", "arbitrary"),
        ),
        cost_estimate=cost,
    )(x_p, w_p, b_p)

    # Strip padding back off.
    return out_p[:m, :n]


def _reference(x, w, b):
    return x @ w.T + b[None, :]


if __name__ == "__main__":
    key = jax.random.PRNGKey(0)
    k_x, k_w, k_b = jax.random.split(key, 3)

    # Small shapes consistent with the module's forward.
    BATCH = 8
    IN_SIZE = 16
    OUT_SIZE = 32
    DROPOUT = 0.5  # unused at inference (eval-mode dropout == identity)

    x = jax.random.normal(k_x, (BATCH, IN_SIZE), dtype=jnp.float32)

    # nn.Linear init: uniform(-1/sqrt(in), 1/sqrt(in)).
    bound = 1.0 / (IN_SIZE ** 0.5)
    w = jax.random.uniform(k_w, (OUT_SIZE, IN_SIZE), minval=-bound,
                           maxval=bound, dtype=jnp.float32)
    b = jax.random.uniform(k_b, (OUT_SIZE,), minval=-bound, maxval=bound,
                           dtype=jnp.float32)

    out = linear_forward(x, w, b)
    out = jax.block_until_ready(out)

    ref = _reference(x, w, b)
    assert out.shape == (BATCH, OUT_SIZE)
    assert jnp.allclose(out, ref, atol=1e-5, rtol=1e-5), "mismatch vs reference"

    print("KERNEL_OK")
</pallas_src>

<mosaic_0001>
module attributes {stable_mosaic.version = 11 : i64} {
  func.func @_linear_kernel(%arg0: i32, %arg1: i32, %arg2: i32, %arg3: memref<128x128xf32, #tpu.memory_space<vmem>>, %arg4: memref<128x128xf32, #tpu.memory_space<vmem>>, %arg5: memref<1x128xf32, #tpu.memory_space<vmem>>, %arg6: memref<128x128xf32, #tpu.memory_space<vmem>>, %arg7: memref<128x128xf32, #tpu.memory_space<vmem>>) attributes {dimension_semantics = [#tpu.dimension_semantics<parallel>, #tpu.dimension_semantics<parallel>, #tpu.dimension_semantics<arbitrary>], iteration_bounds = array<i64: 1, 1, 1>, scalar_prefetch = 0 : i64, scratch_operands = 1 : i64, tpu.core_type = #tpu.core_type<tc>, window_params = [{transform_indices = @transform_0, window_bounds = array<i64: 128, 128>}, {transform_indices = @transform_1, window_bounds = array<i64: 128, 128>}, {transform_indices = @transform_2, window_bounds = array<i64: 1, 128>}, {transform_indices = @transform_3, window_bounds = array<i64: 128, 128>}]} {
    %c0_i32 = arith.constant 0 : i32
    %0 = arith.cmpi eq, %arg2, %c0_i32 : i32
    %1 = arith.extui %0 : i1 to i32
    %c0_i32_0 = arith.constant 0 : i32
    %2 = arith.cmpi ne, %1, %c0_i32_0 : i32
    scf.if %2 {
      %cst_10 = arith.constant 0.000000e+00 : f32
      %12 = vector.broadcast %cst_10 : f32 to vector<128x128xf32>
      %c0_11 = arith.constant 0 : index
      %c0_12 = arith.constant 0 : index
      %13 = vector.load %arg7[%c0_11, %c0_12] : memref<128x128xf32, #tpu.memory_space<vmem>>, vector<128x128xf32>
      tpu.vector_store %arg7[%c0_11, %c0_12], %12 {strides = array<i32>} : memref<128x128xf32, #tpu.memory_space<vmem>>, vector<128x128xf32>,
    } else {
    }
    %c0 = arith.constant 0 : index
    %c0_1 = arith.constant 0 : index
    %3 = vector.load %arg7[%c0, %c0_1] : memref<128x128xf32, #tpu.memory_space<vmem>>, vector<128x128xf32>
    %c0_2 = arith.constant 0 : index
    %c0_3 = arith.constant 0 : index
    %4 = vector.load %arg3[%c0_2, %c0_3] : memref<128x128xf32, #tpu.memory_space<vmem>>, vector<128x128xf32>
    %c0_4 = arith.constant 0 : index
    %c0_5 = arith.constant 0 : index
    %5 = vector.load %arg4[%c0_4, %c0_5] : memref<128x128xf32, #tpu.memory_space<vmem>>, vector<128x128xf32>
    %cst = arith.constant dense<0.000000e+00> : vector<128x128xf32>
    %6 = tpu.matmul %4, %5, %cst {dimension_numbers = #tpu.dot_dimension_numbers<[1], [0], [0], [1], [0, 0, 1, 1], [], []>} : vector<128x128xf32>, vector<128x128xf32>, vector<128x128xf32> -> vector<128x128xf32>
    %7 = arith.addf %3, %6 : vector<128x128xf32>
    %c0_6 = arith.constant 0 : index
    %c0_7 = arith.constant 0 : index
    %8 = vector.load %arg7[%c0_6, %c0_7] : memref<128x128xf32, #tpu.memory_space<vmem>>, vector<128x128xf32>
    tpu.vector_store %arg7[%c0_6, %c0_7], %7 {strides = array<i32>} : memref<128x128xf32, #tpu.memory_space<vmem>>, vector<128x128xf32>,
    %c0_i32_8 = arith.constant 0 : i32
    %9 = arith.cmpi eq, %arg2, %c0_i32_8 : i32
    %10 = arith.extui %9 : i1 to i32
    %c0_i32_9 = arith.constant 0 : i32
    %11 = arith.cmpi ne, %10, %c0_i32_9 : i32
    scf.if %11 {
      %c0_10 = arith.constant 0 : index
      %c0_11 = arith.constant 0 : index
      %12 = vector.load %arg7[%c0_10, %c0_11] : memref<128x128xf32, #tpu.memory_space<vmem>>, vector<128x128xf32>
      %c0_12 = arith.constant 0 : index
      %c0_13 = arith.constant 0 : index
      %13 = vector.load %arg5[%c0_12, %c0_13] : memref<1x128xf32, #tpu.memory_space<vmem>>, vector<1x128xf32>
      %14 = vector.broadcast %13 : vector<1x128xf32> to vector<128x128xf32>
      %15 = arith.addf %12, %14 : vector<128x128xf32>
      %c0_14 = arith.constant 0 : index
      %c0_15 = arith.constant 0 : index
      %16 = vector.load %arg6[%c0_14, %c0_15] : memref<128x128xf32, #tpu.memory_space<vmem>>, vector<128x128xf32>
      tpu.vector_store %arg6[%c0_14, %c0_15], %15 {strides = array<i32>} : memref<128x128xf32, #tpu.memory_space<vmem>>, vector<128x128xf32>,
    } else {
    }
    return
  }
  func.func @transform_0(%arg0: i32, %arg1: i32, %arg2: i32) -> (i32, i32) {
    %c0_i32 = arith.constant 0 : i32
    return %arg0, %arg2 : i32, i32
  }
  func.func @transform_1(%arg0: i32, %arg1: i32, %arg2: i32) -> (i32, i32) {
    %c0_i32 = arith.constant 0 : i32
    return %arg2, %arg1 : i32, i32
  }
  func.func @transform_2(%arg0: i32, %arg1: i32, %arg2: i32) -> (i32, i32) {
    %c0_i32 = arith.constant 0 : i32
    %c0_i32_0 = arith.constant 0 : i32
    return %c0_i32, %arg1 : i32, i32
  }
  func.func @transform_3(%arg0: i32, %arg1: i32, %arg2: i32) -> (i32, i32) {
    %c0_i32 = arith.constant 0 : i32
    return %arg0, %arg1 : i32, i32
  }
}

</mosaic_0001>

<llo_original>
// kernel: tpu_custom_call.1
$region0: #{tpu_custom_call.1}
  #allocation0 [shape = 'u32[]', space=smem, size = 0x4, offset = 0x4, fixed_abs, tag = 'smem constant byte address 0x4 - core index']
  #allocation1 [shape = 'u32[144,128]{1,0:T(1,128)}', space=vmem, size = 0x12000, scoped, tag = 'internal scratch']
  #allocation2 [shape = 'f32[128,128]{1,0:T(8,128)}', space=vmem, size = 0x10000, scoped, tag = 'scratch operand']
  %s0 = inlined_call_operand.hbm [shape: f32[128,128], index: 0, kind: input, shape index: {}]
  %s1 = inlined_call_operand.hbm [shape: f32[128,128], index: 1, kind: input, shape index: {}]
  %s2 = inlined_call_operand.vmem [shape: f32[1,128], index: 2, kind: input, shape index: {}]
  %s3 = inlined_call_operand.hbm [shape: f32[128,128], index: 3, kind: output, shape index: {}]
  %s4 = sld [smem:[#allocation0]]
  $region38: #{tpu_custom_call.1} parent=0
    _
  %s6 = ssub.s32 1, %s4
  %s7 = scalar_select 0, %s6, %s4
  $region1: #{tpu_custom_call.1} parent=0
    #allocation3 [shape = 'u8[65536]{0}', space=vmem, size = 0x10000, scoped, tag = 'input window, operand 0, single buffered']
    #allocation4 [shape = 's32[1]{0}', space=sflag, size = 0x4, scoped, tag = 'scoped memory for tpu_custom_call.1']
    #allocation5 [shape = 's32[1]{0}', space=sflag, size = 0x4, scoped, tag = 'scoped memory for tpu_custom_call.1']
    #allocation6 [shape = 'u8[65536]{0}', space=vmem, size = 0x10000, scoped, tag = 'input window, operand 1, single buffered']
    #allocation7 [shape = 's32[1]{0}', space=sflag, size = 0x4, scoped, tag = 'scoped memory for tpu_custom_call.1']
    #allocation8 [shape = 'u8[65536]{0}', space=vmem, size = 0x10000, scoped, tag = 'output window, operand 0, single buffered']
    %8 = vsyncpa [#allocation4], 0
    %9 = vsyncpa [#allocation7], 0
    %10 = vsyncpa [#allocation5], 0
    // Predicated region
    $region2: #{tpu_custom_call.1} parent=1 // pred_check
      _
    $region3: #{tpu_custom_call.1} parent=1 // pred_check_branch
      %12 = sbr.rel (0) target = $region5
    $region4: #{tpu_custom_call.1} parent=1 // pred_region
      %s14 = ssub.s32 2048, 2048
      %15 = vsyncadd [#allocation4], %s14
      %s16 = sshll.u32 [#allocation3], 4
      %s17 = int_to_ptr.vmem [resolvable:$true] %s16
      %22 = dma.hbm_to_vmem [thread:$0]  %s0, 2048, %s17, [#allocation4], 128, 128, 8
    $region5: #{tpu_custom_call.1} parent=1 // pred_fallthru
      _
    // Predicated region
    $region6: #{tpu_custom_call.1} parent=1 // pred_check
      _
    $region7: #{tpu_custom_call.1} parent=1 // pred_check_branch
      %24 = sbr.rel (0) target = $region9
    $region8: #{tpu_custom_call.1} parent=1 // pred_region
      %s26 = ssub.s32 2048, 2048
      %27 = vsyncadd [#allocation7], %s26
      %s28 = sshll.u32 [#allocation6], 4
      %s29 = int_to_ptr.vmem [resolvable:$true] %s28
      %34 = dma.hbm_to_vmem [thread:$0]  %s1, 2048, %s29, [#allocation7], 128, 128, 8
    $region9: #{tpu_custom_call.1} parent=1 // pred_fallthru
      _
    // Predicated region
    $region10: #{tpu_custom_call.1} parent=1 // pred_check
      _
    $region11: #{tpu_custom_call.1} parent=1 // pred_check_branch
      %36 = sbr.rel (0) target = $region13
    $region12: #{tpu_custom_call.1} parent=1 // pred_region
      _
    $region13: #{tpu_custom_call.1} parent=1 // pred_fallthru
      _
    // Predicated region
    $region14: #{tpu_custom_call.1} parent=1 // pred_check
      _
    $region15: #{tpu_custom_call.1} parent=1 // pred_check_branch
      %38 = sbr.rel (0) target = $region17
    $region16: #{tpu_custom_call.1} parent=1 // pred_region
      %39 = dma.done [#allocation4], 2048
    $region17: #{tpu_custom_call.1} parent=1 // pred_fallthru
      _
    // Predicated region
    $region18: #{tpu_custom_call.1} parent=1 // pred_check
      _
    $region19: #{tpu_custom_call.1} parent=1 // pred_check_branch
      %41 = sbr.rel (0) target = $region21
    $region20: #{tpu_custom_call.1} parent=1 // pred_region
      %42 = dma.done [#allocation7], 2048
    $region21: #{tpu_custom_call.1} parent=1 // pred_fallthru
      _
    %p43 = scmp.eq.s32.totalorder 0, 0
    // Predicated region
    $region22: #{tpu_custom_call.1} parent=1 // pred_check
      %p44 = pneg %p43
    $region23: #{tpu_custom_call.1} parent=1 // pred_check_branch
      %46 = sbr.rel (%p44) target = $region25
    $region24: #{tpu_custom_call.1} parent=1 // pred_region
      %47 = vst [vmem:[#allocation2] sm:$0xff] 0.0
      %48 = vst [vmem:[#allocation2 + $0x8] sm:$0xff] 0.0
      %49 = vst [vmem:[#allocation2 + $0x10] sm:$0xff] 0.0
      %50 = vst [vmem:[#allocation2 + $0x18] sm:$0xff] 0.0
      %51 = vst [vmem:[#allocation2 + $0x20] sm:$0xff] 0.0
      %52 = vst [vmem:[#allocation2 + $0x28] sm:$0xff] 0.0
      %53 = vst [vmem:[#allocation2 + $0x30] sm:$0xff] 0.0
      %54 = vst [vmem:[#allocation2 + $0x38] sm:$0xff] 0.0
      %55 = vst [vmem:[#allocation2 + $0x40] sm:$0xff] 0.0
      %56 = vst [vmem:[#allocation2 + $0x48] sm:$0xff] 0.0
      %57 = vst [vmem:[#allocation2 + $0x50] sm:$0xff] 0.0
      %58 = vst [vmem:[#allocation2 + $0x58] sm:$0xff] 0.0
      %59 = vst [vmem:[#allocation2 + $0x60] sm:$0xff] 0.0
      %60 = vst [vmem:[#allocation2 + $0x68] sm:$0xff] 0.0
      %61 = vst [vmem:[#allocation2 + $0x70] sm:$0xff] 0.0
      %62 = vst [vmem:[#allocation2 + $0x78] sm:$0xff] 0.0
    $region25: #{tpu_custom_call.1} parent=1 // pred_fallthru
      _
    %v63 = vld [vmem:[#allocation2] sm:$0xff]
    %v64 = vld [vmem:[#allocation2 + $0x8] sm:$0xff]
    %v65 = vld [vmem:[#allocation2 + $0x10] sm:$0xff]
    %v66 = vld [vmem:[#allocation2 + $0x18] sm:$0xff]
    %v67 = vld [vmem:[#allocation2 + $0x20] sm:$0xff]
    %v68 = vld [vmem:[#allocation2 + $0x28] sm:$0xff]
    %v69 = vld [vmem:[#allocation2 + $0x30] sm:$0xff]
    %v70 = vld [vmem:[#allocation2 + $0x38] sm:$0xff]
    %v71 = vld [vmem:[#allocation2 + $0x40] sm:$0xff]
    %v72 = vld [vmem:[#allocation2 + $0x48] sm:$0xff]
    %v73 = vld [vmem:[#allocation2 + $0x50] sm:$0xff]
    %v74 = vld [vmem:[#allocation2 + $0x58] sm:$0xff]
    %v75 = vld [vmem:[#allocation2 + $0x60] sm:$0xff]
    %v76 = vld [vmem:[#allocation2 + $0x68] sm:$0xff]
    %v77 = vld [vmem:[#allocation2 + $0x70] sm:$0xff]
    %v78 = vld [vmem:[#allocation2 + $0x78] sm:$0xff]
    %v79 = vld [vmem:[#allocation3] sm:$0xff]
    %v80 = vld [vmem:[#allocation3 + $0x8] sm:$0xff]
    %v81 = vld [vmem:[#allocation3 + $0x10] sm:$0xff]
    %v82 = vld [vmem:[#allocation3 + $0x18] sm:$0xff]
    %v83 = vld [vmem:[#allocation3 + $0x20] sm:$0xff]
    %v84 = vld [vmem:[#allocation3 + $0x28] sm:$0xff]
    %v85 = vld [vmem:[#allocation3 + $0x30] sm:$0xff]
    %v86 = vld [vmem:[#allocation3 + $0x38] sm:$0xff]
    %v87 = vld [vmem:[#allocation3 + $0x40] sm:$0xff]
    %v88 = vld [vmem:[#allocation3 + $0x48] sm:$0xff]
    %v89 = vld [vmem:[#allocation3 + $0x50] sm:$0xff]
    %v90 = vld [vmem:[#allocation3 + $0x58] sm:$0xff]
    %v91 = vld [vmem:[#allocation3 + $0x60] sm:$0xff]
    %v92 = vld [vmem:[#allocation3 + $0x68] sm:$0xff]
    %v93 = vld [vmem:[#allocation3 + $0x70] sm:$0xff]
    %v94 = vld [vmem:[#allocation3 + $0x78] sm:$0xff]
    %v95 = vld [vmem:[#allocation6] sm:$0xff]
    %v96 = vld [vmem:[#allocation6 + $0x8] sm:$0xff]
    %v97 = vld [vmem:[#allocation6 + $0x10] sm:$0xff]
    %v98 = vld [vmem:[#allocation6 + $0x18] sm:$0xff]
    %v99 = vld [vmem:[#allocation6 + $0x20] sm:$0xff]
    %v100 = vld [vmem:[#allocation6 + $0x28] sm:$0xff]
    %v101 = vld [vmem:[#allocation6 + $0x30] sm:$0xff]
    %v102 = vld [vmem:[#allocation6 + $0x38] sm:$0xff]
    %v103 = vld [vmem:[#allocation6 + $0x40] sm:$0xff]
    %v104 = vld [vmem:[#allocation6 + $0x48] sm:$0xff]
    %v105 = vld [vmem:[#allocation6 + $0x50] sm:$0xff]
    %v106 = vld [vmem:[#allocation6 + $0x58] sm:$0xff]
    %v107 = vld [vmem:[#allocation6 + $0x60] sm:$0xff]
    %v108 = vld [vmem:[#allocation6 + $0x68] sm:$0xff]
    %v109 = vld [vmem:[#allocation6 + $0x70] sm:$0xff]
    %v110 = vld [vmem:[#allocation6 + $0x78] sm:$0xff]
    %111 = vmatprep.subr.mxu0 0.0
    %112 = vmatpush1.msra.mxu0 %v110
    %113 = vmatprep.subr.mxu0 0.0
    %114 = vmatpush1.msra.mxu0 %v109
    %115 = vmatprep.subr.mxu0 0.0
    %116 = vmatpush1.msra.mxu0 %v108
    %117 = vmatprep.subr.mxu0 0.0
    %118 = vmatpush1.msra.mxu0 %v107
    %119 = vmatprep.subr.mxu0 0.0
    %120 = vmatpush1.msra.mxu0 %v106
    %121 = vmatprep.subr.mxu0 0.0
    %122 = vmatpush1.msra.mxu0 %v105
    %123 = vmatprep.subr.mxu0 0.0
    %124 = vmatpush1.msra.mxu0 %v104
    %125 = vmatprep.subr.mxu0 0.0
    %126 = vmatpush1.msra.mxu0 %v103
    %127 = vmatprep.subr.mxu0 0.0
    %128 = vmatpush1.msra.mxu0 %v102
    %129 = vmatprep.subr.mxu0 0.0
    %130 = vmatpush1.msra.mxu0 %v101
    %131 = vmatprep.subr.mxu0 0.0
    %132 = vmatpush1.msra.mxu0 %v100
    %133 = vmatprep.subr.mxu0 0.0
    %134 = vmatpush1.msra.mxu0 %v99
    %135 = vmatprep.subr.mxu0 0.0
    %136 = vmatpush1.msra.mxu0 %v98
    %137 = vmatprep.subr.mxu0 0.0
    %138 = vmatpush1.msra.mxu0 %v97
    %139 = vmatprep.subr.mxu0 0.0
    %140 = vmatpush1.msra.mxu0 %v96
    %141 = vmatprep.subr.mxu0 0.0
    %142 = vmatpush1.msra.mxu0 %v95
    %143 = vmatprep.subr.mxu0 0.0
    %144 = vmatpush2.msra.mxu0 0.0
    %145 = vmatprep.subr.mxu0 0.0
    %146 = vmatpush2.msra.mxu0 0.0
    %147 = vmatprep.subr.mxu0 0.0
    %148 = vmatpush2.msra.mxu0 0.0
    %149 = vmatprep.subr.mxu0 0.0
    %150 = vmatpush2.msra.mxu0 0.0
    %151 = vmatprep.subr.mxu0 0.0
    %152 = vmatpush2.msra.mxu0 0.0
    %153 = vmatprep.subr.mxu0 0.0
    %154 = vmatpush2.msra.mxu0 0.0
    %155 = vmatprep.subr.mxu0 0.0
    %156 = vmatpush2.msra.mxu0 0.0
    %157 = vmatprep.subr.mxu0 0.0
    %158 = vmatpush2.msra.mxu0 0.0
    %159 = vmatprep.subr.mxu0 0.0
    %160 = vmatpush2.msra.mxu0 0.0
    %161 = vmatprep.subr.mxu0 0.0
    %162 = vmatpush2.msra.mxu0 0.0
    %163 = vmatprep.subr.mxu0 0.0
    %164 = vmatpush2.msra.mxu0 0.0
    %165 = vmatprep.subr.mxu0 0.0
    %166 = vmatpush2.msra.mxu0 0.0
    %167 = vmatprep.subr.mxu0 0.0
    %168 = vmatpush2.msra.mxu0 0.0
    %169 = vmatprep.subr.mxu0 0.0
    %170 = vmatpush2.msra.mxu0 0.0
    %171 = vmatprep.subr.mxu0 0.0
    %172 = vmatpush2.msra.mxu0 0.0
    %173 = vmatprep.subr.mxu0 0.0
    %174 = vmatpush2.msra.mxu0 0.0
    %175 = vmatprep.mubr.f32.mxu0 0.0
    %176 = vmatmul.mubr.f32.gmra.mxu0 %v79
    %v177 = vpop.f32.mrf.mxu0
    %v178 = vadd.f32 0.0, %v177
    %v179 = vpop.f32.mrf.mxu0
    %180 = vmatprep.mubr.f32.mxu0 0.0
    %181 = vmatmul.mubr.f32.gmra.mxu0 %v80
    %v182 = vpop.f32.mrf.mxu0
    %v183 = vadd.f32 0.0, %v182
    %v184 = vpop.f32.mrf.mxu0
    %185 = vmatprep.mubr.f32.mxu0 0.0
    %186 = vmatmul.mubr.f32.gmra.mxu0 %v81
    %v187 = vpop.f32.mrf.mxu0
    %v188 = vadd.f32 0.0, %v187
    %v189 = vpop.f32.mrf.mxu0
    %190 = vmatprep.mubr.f32.mxu0 0.0
    %191 = vmatmul.mubr.f32.gmra.mxu0 %v82
    %v192 = vpop.f32.mrf.mxu0
    %v193 = vadd.f32 0.0, %v192
    %v194 = vpop.f32.mrf.mxu0
    %195 = vmatprep.mubr.f32.mxu0 0.0
    %196 = vmatmul.mubr.f32.gmra.mxu0 %v83
    %v197 = vpop.f32.mrf.mxu0
    %v198 = vadd.f32 0.0, %v197
    %v199 = vpop.f32.mrf.mxu0
    %200 = vmatprep.mubr.f32.mxu0 0.0
    %201 = vmatmul.mubr.f32.gmra.mxu0 %v84
    %v202 = vpop.f32.mrf.mxu0
    %v203 = vadd.f32 0.0, %v202
    %v204 = vpop.f32.mrf.mxu0
    %205 = vmatprep.mubr.f32.mxu0 0.0
    %206 = vmatmul.mubr.f32.gmra.mxu0 %v85
    %v207 = vpop.f32.mrf.mxu0
    %v208 = vadd.f32 0.0, %v207
    %v209 = vpop.f32.mrf.mxu0
    %210 = vmatprep.mubr.f32.mxu0 0.0
    %211 = vmatmul.mubr.f32.gmra.mxu0 %v86
    %v212 = vpop.f32.mrf.mxu0
    %v213 = vadd.f32 0.0, %v212
    %v214 = vpop.f32.mrf.mxu0
    %215 = vmatprep.mubr.f32.mxu0 0.0
    %216 = vmatmul.mubr.f32.gmra.mxu0 %v87
    %v217 = vpop.f32.mrf.mxu0
    %v218 = vadd.f32 0.0, %v217
    %v219 = vpop.f32.mrf.mxu0
    %220 = vmatprep.mubr.f32.mxu0 0.0
    %221 = vmatmul.mubr.f32.gmra.mxu0 %v88
    %v222 = vpop.f32.mrf.mxu0
    %v223 = vadd.f32 0.0, %v222
    %v224 = vpop.f32.mrf.mxu0
    %225 = vmatprep.mubr.f32.mxu0 0.0
    %226 = vmatmul.mubr.f32.gmra.mxu0 %v89
    %v227 = vpop.f32.mrf.mxu0
    %v228 = vadd.f32 0.0, %v227
    %v229 = vpop.f32.mrf.mxu0
    %230 = vmatprep.mubr.f32.mxu0 0.0
    %231 = vmatmul.mubr.f32.gmra.mxu0 %v90
    %v232 = vpop.f32.mrf.mxu0
    %v233 = vadd.f32 0.0, %v232
    %v234 = vpop.f32.mrf.mxu0
    %235 = vmatprep.mubr.f32.mxu0 0.0
    %236 = vmatmul.mubr.f32.gmra.mxu0 %v91
    %v237 = vpop.f32.mrf.mxu0
    %v238 = vadd.f32 0.0, %v237
    %v239 = vpop.f32.mrf.mxu0
    %240 = vmatprep.mubr.f32.mxu0 0.0
    %241 = vmatmul.mubr.f32.gmra.mxu0 %v92
    %v242 = vpop.f32.mrf.mxu0
    %v243 = vadd.f32 0.0, %v242
    %v244 = vpop.f32.mrf.mxu0
    %245 = vmatprep.mubr.f32.mxu0 0.0
    %246 = vmatmul.mubr.f32.gmra.mxu0 %v93
    %v247 = vpop.f32.mrf.mxu0
    %v248 = vadd.f32 0.0, %v247
    %v249 = vpop.f32.mrf.mxu0
    %250 = vmatprep.mubr.f32.mxu0 0.0
    %251 = vmatmul.mubr.f32.gmra.mxu0 %v94
    %v252 = vpop.f32.mrf.mxu0
    %v253 = vadd.f32 0.0, %v252
    %v254 = vpop.f32.mrf.mxu0
    %255 = vdwg.mxu0
    %v256 = vadd.f32 %v63, %v178
    %v257 = vadd.f32 %v64, %v183
    %v258 = vadd.f32 %v65, %v188
    %v259 = vadd.f32 %v66, %v193
    %v260 = vadd.f32 %v67, %v198
    %v261 = vadd.f32 %v68, %v203
    %v262 = vadd.f32 %v69, %v208
    %v263 = vadd.f32 %v70, %v213
    %v264 = vadd.f32 %v71, %v218
    %v265 = vadd.f32 %v72, %v223
    %v266 = vadd.f32 %v73, %v228
    %v267 = vadd.f32 %v74, %v233
    %v268 = vadd.f32 %v75, %v238
    %v269 = vadd.f32 %v76, %v243
    %v270 = vadd.f32 %v77, %v248
    %v271 = vadd.f32 %v78, %v253
    %272 = vst [vmem:[#allocation2] sm:$0xff] %v256
    %273 = vst [vmem:[#allocation2 + $0x8] sm:$0xff] %v257
    %274 = vst [vmem:[#allocation2 + $0x10] sm:$0xff] %v258
    %275 = vst [vmem:[#allocation2 + $0x18] sm:$0xff] %v259
    %276 = vst [vmem:[#allocation2 + $0x20] sm:$0xff] %v260
    %277 = vst [vmem:[#allocation2 + $0x28] sm:$0xff] %v261
    %278 = vst [vmem:[#allocation2 + $0x30] sm:$0xff] %v262
    %279 = vst [vmem:[#allocation2 + $0x38] sm:$0xff] %v263
    %280 = vst [vmem:[#allocation2 + $0x40] sm:$0xff] %v264
    %281 = vst [vmem:[#allocation2 + $0x48] sm:$0xff] %v265
    %282 = vst [vmem:[#allocation2 + $0x50] sm:$0xff] %v266
    %283 = vst [vmem:[#allocation2 + $0x58] sm:$0xff] %v267
    %284 = vst [vmem:[#allocation2 + $0x60] sm:$0xff] %v268
    %285 = vst [vmem:[#allocation2 + $0x68] sm:$0xff] %v269
    %286 = vst [vmem:[#allocation2 + $0x70] sm:$0xff] %v270
    %287 = vst [vmem:[#allocation2 + $0x78] sm:$0xff] %v271
    // Predicated region
    $region26: #{tpu_custom_call.1} parent=1 // pred_check
      %p288 = pneg %p43
    $region27: #{tpu_custom_call.1} parent=1 // pred_check_branch
      %290 = sbr.rel (%p288) target = $region29
    $region28: #{tpu_custom_call.1} parent=1 // pred_region
      %v291 = vld [vmem:[#allocation2] sm:$0xff]
      %v292 = vld [vmem:[#allocation2 + $0x8] sm:$0xff]
      %v293 = vld [vmem:[#allocation2 + $0x10] sm:$0xff]
      %v294 = vld [vmem:[#allocation2 + $0x18] sm:$0xff]
      %v295 = vld [vmem:[#allocation2 + $0x20] sm:$0xff]
      %v296 = vld [vmem:[#allocation2 + $0x28] sm:$0xff]
      %v297 = vld [vmem:[#allocation2 + $0x30] sm:$0xff]
      %v298 = vld [vmem:[#allocation2 + $0x38] sm:$0xff]
      %v299 = vld [vmem:[#allocation2 + $0x40] sm:$0xff]
      %v300 = vld [vmem:[#allocation2 + $0x48] sm:$0xff]
      %v301 = vld [vmem:[#allocation2 + $0x50] sm:$0xff]
      %v302 = vld [vmem:[#allocation2 + $0x58] sm:$0xff]
      %v303 = vld [vmem:[#allocation2 + $0x60] sm:$0xff]
      %v304 = vld [vmem:[#allocation2 + $0x68] sm:$0xff]
      %v305 = vld [vmem:[#allocation2 + $0x70] sm:$0xff]
      %v306 = vld [vmem:[#allocation2 + $0x78] sm:$0xff]
      %v307 = vld [vmem:[%s2] sm:$0x1]
      %v309 = vlaneseq
      %v310 = vshrl.u32 %v309, 7
      %v311 = vsub.s32 0, %v310
      %v312 = vrot.slane %v307, %v311
      %v314 = vadd.f32 %v291, %v312
      %v315 = vadd.f32 %v292, %v312
      %v316 = vadd.f32 %v293, %v312
      %v317 = vadd.f32 %v294, %v312
      %v318 = vadd.f32 %v295, %v312
      %v319 = vadd.f32 %v296, %v312
      %v320 = vadd.f32 %v297, %v312
      %v321 = vadd.f32 %v298, %v312
      %v322 = vadd.f32 %v299, %v312
      %v323 = vadd.f32 %v300, %v312
      %v324 = vadd.f32 %v301, %v312
      %v325 = vadd.f32 %v302, %v312
      %v326 = vadd.f32 %v303, %v312
      %v327 = vadd.f32 %v304, %v312
      %v328 = vadd.f32 %v305, %v312
      %v329 = vadd.f32 %v306, %v312
      %330 = vst [vmem:[#allocation8] sm:$0xff] %v314
      %331 = vst [vmem:[#allocation8 + $0x8] sm:$0xff] %v315
      %332 = vst [vmem:[#allocation8 + $0x10] sm:$0xff] %v316
      %333 = vst [vmem:[#allocation8 + $0x18] sm:$0xff] %v317
      %334 = vst [vmem:[#allocation8 + $0x20] sm:$0xff] %v318
      %335 = vst [vmem:[#allocation8 + $0x28] sm:$0xff] %v319
      %336 = vst [vmem:[#allocation8 + $0x30] sm:$0xff] %v320
      %337 = vst [vmem:[#allocation8 + $0x38] sm:$0xff] %v321
      %338 = vst [vmem:[#allocation8 + $0x40] sm:$0xff] %v322
      %339 = vst [vmem:[#allocation8 + $0x48] sm:$0xff] %v323
      %340 = vst [vmem:[#allocation8 + $0x50] sm:$0xff] %v324
      %341 = vst [vmem:[#allocation8 + $0x58] sm:$0xff] %v325
      %342 = vst [vmem:[#allocation8 + $0x60] sm:$0xff] %v326
      %343 = vst [vmem:[#allocation8 + $0x68] sm:$0xff] %v327
      %344 = vst [vmem:[#allocation8 + $0x70] sm:$0xff] %v328
      %345 = vst [vmem:[#allocation8 + $0x78] sm:$0xff] %v329
    $region29: #{tpu_custom_call.1} parent=1 // pred_fallthru
      _
    // Predicated region
    $region30: #{tpu_custom_call.1} parent=1 // pred_check
      _
    $region31: #{tpu_custom_call.1} parent=1 // pred_check_branch
      %347 = sbr.rel (0) target = $region33
    $region32: #{tpu_custom_call.1} parent=1 // pred_region
      %s349 = ssub.s32 2048, 2048
      %350 = vsyncadd [#allocation5], %s349
      %s351 = sshll.u32 [#allocation8], 4
      %s352 = int_to_ptr.vmem [resolvable:$true] %s351
      %357 = dma.vmem_to_hbm [thread:$0]  %s352, 2048, %s3, [#allocation5], 128, 128, 8
    $region33: #{tpu_custom_call.1} parent=1 // pred_fallthru
      _
    // Predicated region
    $region34: #{tpu_custom_call.1} parent=1 // pred_check
      _
    $region35: #{tpu_custom_call.1} parent=1 // pred_check_branch
      %359 = sbr.rel (0) target = $region37
    $region36: #{tpu_custom_call.1} parent=1 // pred_region
      %360 = dma.done [#allocation5], 2048
    $region37: #{tpu_custom_call.1} parent=1 // pred_fallthru
      _
    %361 = vsyncpa [#allocation4], 1
    %362 = vsyncpa [#allocation7], 1
    %363 = vsyncpa [#allocation5], 1

</llo_original>
